<compile_context>
chip_gen: v5e
topology: v5e:2x2
jax: 0.10.0
libtpu: 0.0.40
codegen_flags: <defaults>
</compile_context>

<pallas_src>
import jax
import jax.numpy as jnp
from jax.experimental import pallas as pl
from jax.experimental.pallas import tpu as pltpu

_LANES = 128


def _ssi_partials_kernel(pred_ref, targ_ref, mask_ref, out_ref):
    # Tiles: pred/targ (bt, R, 128) f32; mask (bt, R, 128) int8 or f32.
    pred = pred_ref[...]
    traw = targ_ref[...]                       # raw target (affine folded below)
    mask = mask_ref[...].astype(jnp.float32)

    # Sublane-first reduction: axis=1 (R) is elementwise vreg adds on the VALU,
    # leaving a single cross-lane (XLU) reduce per moment at the very end.
    def lane_part(x):                          # (bt, R, 128) -> (bt, 1, 128)
        return jnp.sum(x, axis=1, keepdims=True)

    def finish(x):                             # (bt, 1, 128) -> (bt, 1, 1)
        return jnp.sum(x, axis=2, keepdims=True)

    mp = mask * pred
    a_00 = finish(lane_part(mp * pred))        # Σ m·p·p
    a_01 = finish(lane_part(mp))               # Σ m·p
    a_11 = finish(lane_part(mask))             # Σ m
    s_mpt = finish(lane_part(mp * traw))       # Σ m·p·t_raw
    s_mt = finish(lane_part(mask * traw))      # Σ m·t_raw

    # target = 50*t_raw + 0.5 folded into the moments.
    b_0 = 50.0 * s_mpt + 0.5 * a_01
    b_1 = 50.0 * s_mt + 0.5 * a_11

    det = a_00 * a_11 - a_01 * a_01
    valid = det != 0.0                         # exact-zero test, as in the spec
    safe_det = jnp.where(valid, det, 1.0)
    scale = jnp.where(valid, (a_11 * b_0 - a_01 * b_1) / safe_det, 0.0)
    shift = jnp.where(valid, (-a_01 * b_0 + a_00 * b_1) / safe_det, 0.0)

    # err = (scale*pred + shift - (50*t_raw + 0.5)) * mask
    err = (scale * pred + (shift - 0.5) - 50.0 * traw) * mask
    abs_sum = finish(lane_part(jnp.abs(err)))  # Σ |depth_error| per image

    # Pack [Σ|err|, Σ mask] into one (bt, 1, 2) output block.
    out_ref[...] = jnp.concatenate([abs_sum, a_11], axis=2)


def _vmem_cap_bytes():
    """Scoped-VMEM cap: <=48 MiB, and <=3/4 of physical VMEM when queryable."""
    try:
        cap = int(pltpu.get_tpu_info().vmem_capacity_bytes)
        return min(48 << 20, cap * 3 // 4)
    except Exception:  # pragma: no cover - conservative fallback
        return 48 << 20


def _choose_block_batch(batch, elems_per_image, mask_bytes):
    """Images per grid step: amortize per-step overhead, bound VMEM, keep >=2 steps."""
    # Double-buffered input windows (f32 pred + f32 targ + mask) plus ~3 live
    # full-tile f32 temporaries materialized in the kernel body.
    bytes_per_elem = 2 * (4 + 4 + mask_bytes) + 3 * 4
    vmem_budget = 24 << 20
    min_elems_per_step = 128 * 1024
    max_bt = batch // 2 if batch > 1 else 1    # >=2 grid steps -> megacore on v7x
    best = 1
    for d in range(1, max_bt + 1):
        if batch % d:
            continue
        if d > 1 and d * elems_per_image * bytes_per_elem > vmem_budget:
            break
        best = d
        if d * elems_per_image >= min_elems_per_step:
            break
    return best


def scale_and_shift_invariant_loss(prediction, target, mask):
    """prediction, target: (B, H, W) float; mask: (B, H, W) bool/int/float.

    Returns scalar:  sum_b |(s_b*pred_b + t_b - (50*targ_b+0.5)) * m_b|
                     / (sum(mask) + 1e-5)
    """
    B, H, W = prediction.shape
    hw = H * W

    m = jnp.asarray(mask)
    if m.dtype in (jnp.bool_, jnp.int8):
        mask_dtype, mask_bytes = jnp.int8, 1   # 1 B/elem HBM traffic for binary masks
    else:
        mask_dtype, mask_bytes = jnp.float32, 4  # preserve non-binary weights

    # int8 native tiling is (32,128): pad hw to a multiple of 4096 so mask
    # vregs stay fully packed; f32-only masks need just 8*128.
    sublanes = 32 if mask_bytes == 1 else 8
    tile = _LANES * sublanes
    hw_pad = ((hw + tile - 1) // tile) * tile
    R = hw_pad // _LANES

    def _flat(x, dtype):
        x = x.reshape(B, hw).astype(dtype)
        if hw_pad != hw:
            x = jnp.pad(x, ((0, 0), (0, hw_pad - hw)))   # mask pad = 0 kills padding
        return x.reshape(B, R, _LANES)

    pred3 = _flat(prediction, jnp.float32)
    targ3 = _flat(target, jnp.float32)
    mask3 = _flat(m, mask_dtype)

    bt = _choose_block_batch(B, hw_pad, mask_bytes)
    grid = (B // bt,)

    in_blk = pl.BlockSpec((bt, R, _LANES), lambda i: (i, 0, 0))
    out_blk = pl.BlockSpec((bt, 1, 2), lambda i: (i, 0, 0))

    # Scoped-VMEM limit sized from the actual per-step footprint (double-
    # buffered inputs + in-kernel temporaries), capped below physical VMEM.
    step_bytes = bt * R * _LANES * (2 * (4 + 4 + mask_bytes) + 3 * 4)
    vmem_limit = int(min(max(step_bytes + (4 << 20), 32 << 20), _vmem_cap_bytes()))

    parts = pl.pallas_call(
        _ssi_partials_kernel,
        out_shape=jax.ShapeDtypeStruct((B, 1, 2), jnp.float32),
        grid_spec=pltpu.PrefetchScalarGridSpec(
            num_scalar_prefetch=0,
            grid=grid,
            in_specs=[in_blk, in_blk, in_blk],
            out_specs=out_blk,
        ),
        compiler_params=pltpu.CompilerParams(
            dimension_semantics=("parallel",),   # disjoint per-step outputs
            vmem_limit_bytes=vmem_limit,
        ),
    )(pred3, targ3, mask3)

    abs_sum = parts[:, 0, 0]
    cnt_sum = parts[:, 0, 1]
    # Global normalization, exactly as the PyTorch module:
    #   sum |depth_error| / (mask.sum() + 1e-5)
    return jnp.sum(abs_sum) / (jnp.sum(cnt_sum) + 1e-5)


def _reference(prediction, target, mask):
    """Pure-JAX reference mirroring the PyTorch module, for verification."""
    target = target * 50 + 0.5
    a_00 = jnp.sum(mask * prediction * prediction, axis=(1, 2))
    a_01 = jnp.sum(mask * prediction, axis=(1, 2))
    a_11 = jnp.sum(mask, axis=(1, 2))
    b_0 = jnp.sum(mask * prediction * target, axis=(1, 2))
    b_1 = jnp.sum(mask * target, axis=(1, 2))
    det = a_00 * a_11 - a_01 * a_01
    valid = det != 0
    safe = jnp.where(valid, det, 1.0)
    x_0 = jnp.where(valid, (a_11 * b_0 - a_01 * b_1) / safe, 0.0)
    x_1 = jnp.where(valid, (-a_01 * b_0 + a_00 * b_1) / safe, 0.0)
    pred_depth = x_0[:, None, None] * prediction + x_1[:, None, None]
    depth_error = (pred_depth - target) * mask
    return jnp.sum(jnp.abs(depth_error)) / (jnp.sum(mask) + 1e-5)


if __name__ == "__main__":
    key = jax.random.PRNGKey(0)
    k1, k2, k3 = jax.random.split(key, 3)
    B, H, W = 2, 16, 16
    prediction = jax.random.normal(k1, (B, H, W), dtype=jnp.float32)
    target = jax.random.normal(k2, (B, H, W), dtype=jnp.float32)
    mask = jax.random.uniform(k3, (B, H, W)) > 0.3          # binary bool mask

    loss = scale_and_shift_invariant_loss(prediction, target, mask)
    loss = jax.block_until_ready(loss)

    ref = _reference(prediction, target, mask.astype(jnp.float32))
    assert jnp.allclose(loss, ref, rtol=1e-4, atol=1e-5), (loss, ref)

    print("KERNEL_OK")
</pallas_src>

<mosaic_0001>
module attributes {stable_mosaic.version = 11 : i64} {
  func.func @_ssi_partials_kernel(%arg0: i32, %arg1: memref<1x32x128xf32, #tpu.memory_space<vmem>>, %arg2: memref<1x32x128xf32, #tpu.memory_space<vmem>>, %arg3: memref<1x32x128xi8, #tpu.memory_space<vmem>>, %arg4: memref<1x1x2xf32, #tpu.memory_space<vmem>>) attributes {dimension_semantics = [#tpu.dimension_semantics<parallel>], iteration_bounds = array<i64: 2>, scalar_prefetch = 0 : i64, scratch_operands = 0 : i64, tpu.core_type = #tpu.core_type<tc>, window_params = [{transform_indices = @transform_0, window_bounds = array<i64: 1, 32, 128>}, {transform_indices = @transform_1, window_bounds = array<i64: 1, 32, 128>}, {transform_indices = @transform_2, window_bounds = array<i64: 1, 32, 128>}, {transform_indices = @transform_3, window_bounds = array<i64: 1, 1, 2>}]} {
    %c0 = arith.constant 0 : index
    %c0_0 = arith.constant 0 : index
    %c0_1 = arith.constant 0 : index
    %0 = vector.load %arg1[%c0, %c0_0, %c0_1] : memref<1x32x128xf32, #tpu.memory_space<vmem>>, vector<1x32x128xf32>
    %c0_2 = arith.constant 0 : index
    %c0_3 = arith.constant 0 : index
    %c0_4 = arith.constant 0 : index
    %1 = vector.load %arg2[%c0_2, %c0_3, %c0_4] : memref<1x32x128xf32, #tpu.memory_space<vmem>>, vector<1x32x128xf32>
    %c0_5 = arith.constant 0 : index
    %c0_6 = arith.constant 0 : index
    %c0_7 = arith.constant 0 : index
    %2 = vector.load %arg3[%c0_5, %c0_6, %c0_7] : memref<1x32x128xi8, #tpu.memory_space<vmem>>, vector<1x32x128xi8>
    %3 = arith.sitofp %2 : vector<1x32x128xi8> to vector<1x32x128xf32>
    %4 = arith.mulf %3, %0 : vector<1x32x128xf32>
    %5 = arith.mulf %4, %0 : vector<1x32x128xf32>
    %cst = arith.constant dense<0.000000e+00> : vector<1x128xf32>
    %6 = vector.multi_reduction <add>, %5, %cst [1] : vector<1x32x128xf32> to vector<1x128xf32>
    %7 = vector.shape_cast %6 : vector<1x128xf32> to vector<1x1x128xf32>
    %cst_8 = arith.constant dense<0.000000e+00> : vector<1x1xf32>
    %8 = vector.multi_reduction <add>, %7, %cst_8 [2] : vector<1x1x128xf32> to vector<1x1xf32>
    %9 = vector.shape_cast %8 : vector<1x1xf32> to vector<1x1x1xf32>
    %cst_9 = arith.constant dense<0.000000e+00> : vector<1x128xf32>
    %10 = vector.multi_reduction <add>, %4, %cst_9 [1] : vector<1x32x128xf32> to vector<1x128xf32>
    %11 = vector.shape_cast %10 : vector<1x128xf32> to vector<1x1x128xf32>
    %cst_10 = arith.constant dense<0.000000e+00> : vector<1x1xf32>
    %12 = vector.multi_reduction <add>, %11, %cst_10 [2] : vector<1x1x128xf32> to vector<1x1xf32>
    %13 = vector.shape_cast %12 : vector<1x1xf32> to vector<1x1x1xf32>
    %cst_11 = arith.constant dense<0.000000e+00> : vector<1x128xf32>
    %14 = vector.multi_reduction <add>, %3, %cst_11 [1] : vector<1x32x128xf32> to vector<1x128xf32>
    %15 = vector.shape_cast %14 : vector<1x128xf32> to vector<1x1x128xf32>
    %cst_12 = arith.constant dense<0.000000e+00> : vector<1x1xf32>
    %16 = vector.multi_reduction <add>, %15, %cst_12 [2] : vector<1x1x128xf32> to vector<1x1xf32>
    %17 = vector.shape_cast %16 : vector<1x1xf32> to vector<1x1x1xf32>
    %18 = arith.mulf %4, %1 : vector<1x32x128xf32>
    %cst_13 = arith.constant dense<0.000000e+00> : vector<1x128xf32>
    %19 = vector.multi_reduction <add>, %18, %cst_13 [1] : vector<1x32x128xf32> to vector<1x128xf32>
    %20 = vector.shape_cast %19 : vector<1x128xf32> to vector<1x1x128xf32>
    %cst_14 = arith.constant dense<0.000000e+00> : vector<1x1xf32>
    %21 = vector.multi_reduction <add>, %20, %cst_14 [2] : vector<1x1x128xf32> to vector<1x1xf32>
    %22 = vector.shape_cast %21 : vector<1x1xf32> to vector<1x1x1xf32>
    %23 = arith.mulf %3, %1 : vector<1x32x128xf32>
    %cst_15 = arith.constant dense<0.000000e+00> : vector<1x128xf32>
    %24 = vector.multi_reduction <add>, %23, %cst_15 [1] : vector<1x32x128xf32> to vector<1x128xf32>
    %25 = vector.shape_cast %24 : vector<1x128xf32> to vector<1x1x128xf32>
    %cst_16 = arith.constant dense<0.000000e+00> : vector<1x1xf32>
    %26 = vector.multi_reduction <add>, %25, %cst_16 [2] : vector<1x1x128xf32> to vector<1x1xf32>
    %27 = vector.shape_cast %26 : vector<1x1xf32> to vector<1x1x1xf32>
    %cst_17 = arith.constant 5.000000e+01 : f32
    %28 = vector.broadcast %cst_17 : f32 to vector<1x1x1xf32>
    %29 = arith.mulf %28, %22 : vector<1x1x1xf32>
    %cst_18 = arith.constant 5.000000e-01 : f32
    %30 = vector.broadcast %cst_18 : f32 to vector<1x1x1xf32>
    %31 = arith.mulf %30, %13 : vector<1x1x1xf32>
    %32 = arith.addf %29, %31 : vector<1x1x1xf32>
    %cst_19 = arith.constant 5.000000e+01 : f32
    %33 = vector.broadcast %cst_19 : f32 to vector<1x1x1xf32>
    %34 = arith.mulf %33, %27 : vector<1x1x1xf32>
    %cst_20 = arith.constant 5.000000e-01 : f32
    %35 = vector.broadcast %cst_20 : f32 to vector<1x1x1xf32>
    %36 = arith.mulf %35, %17 : vector<1x1x1xf32>
    %37 = arith.addf %34, %36 : vector<1x1x1xf32>
    %38 = arith.mulf %9, %17 : vector<1x1x1xf32>
    %39 = arith.mulf %13, %13 : vector<1x1x1xf32>
    %40 = arith.subf %38, %39 : vector<1x1x1xf32>
    %cst_21 = arith.constant 0.000000e+00 : f32
    %41 = vector.broadcast %cst_21 : f32 to vector<1x1x1xf32>
    %42 = arith.cmpf one, %40, %41 : vector<1x1x1xf32>
    %cst_22 = arith.constant 1.000000e+00 : f32
    %43 = vector.broadcast %cst_22 : f32 to vector<1x1x1xf32>
    %44 = arith.select %42, %40, %43 : vector<1x1x1xi1>, vector<1x1x1xf32>
    %45 = arith.mulf %17, %32 : vector<1x1x1xf32>
    %46 = arith.mulf %13, %37 : vector<1x1x1xf32>
    %47 = arith.subf %45, %46 : vector<1x1x1xf32>
    %48 = arith.divf %47, %44 : vector<1x1x1xf32>
    %cst_23 = arith.constant 0.000000e+00 : f32
    %49 = vector.broadcast %cst_23 : f32 to vector<1x1x1xf32>
    %50 = arith.select %42, %48, %49 : vector<1x1x1xi1>, vector<1x1x1xf32>
    %cst_24 = arith.constant 0.000000e+00 : f32
    %51 = vector.broadcast %cst_24 : f32 to vector<1x1x1xf32>
    %52 = arith.subf %51, %13 : vector<1x1x1xf32>
    %53 = arith.mulf %52, %32 : vector<1x1x1xf32>
    %54 = arith.mulf %9, %37 : vector<1x1x1xf32>
    %55 = arith.addf %53, %54 : vector<1x1x1xf32>
    %56 = arith.divf %55, %44 : vector<1x1x1xf32>
    %cst_25 = arith.constant 0.000000e+00 : f32
    %57 = vector.broadcast %cst_25 : f32 to vector<1x1x1xf32>
    %58 = arith.select %42, %56, %57 : vector<1x1x1xi1>, vector<1x1x1xf32>
    %59 = vector.broadcast %50 : vector<1x1x1xf32> to vector<1x32x128xf32>
    %60 = arith.mulf %59, %0 : vector<1x32x128xf32>
    %cst_26 = arith.constant 5.000000e-01 : f32
    %61 = vector.broadcast %cst_26 : f32 to vector<1x1x1xf32>
    %62 = arith.subf %58, %61 : vector<1x1x1xf32>
    %63 = vector.broadcast %62 : vector<1x1x1xf32> to vector<1x32x128xf32>
    %64 = arith.addf %60, %63 : vector<1x32x128xf32>
    %cst_27 = arith.constant 5.000000e+01 : f32
    %65 = vector.broadcast %cst_27 : f32 to vector<1x32x128xf32>
    %66 = arith.mulf %65, %1 : vector<1x32x128xf32>
    %67 = arith.subf %64, %66 : vector<1x32x128xf32>
    %68 = arith.mulf %67, %3 : vector<1x32x128xf32>
    %69 = math.absf %68 : vector<1x32x128xf32>
    %cst_28 = arith.constant dense<0.000000e+00> : vector<1x128xf32>
    %70 = vector.multi_reduction <add>, %69, %cst_28 [1] : vector<1x32x128xf32> to vector<1x128xf32>
    %71 = vector.shape_cast %70 : vector<1x128xf32> to vector<1x1x128xf32>
    %cst_29 = arith.constant dense<0.000000e+00> : vector<1x1xf32>
    %72 = vector.multi_reduction <add>, %71, %cst_29 [2] : vector<1x1x128xf32> to vector<1x1xf32>
    %73 = vector.shape_cast %72 : vector<1x1xf32> to vector<1x1x1xf32>
    %74 = tpu.concatenate %73, %17 in 2 : vector<1x1x1xf32>, vector<1x1x1xf32> -> vector<1x1x2xf32>
    %c0_30 = arith.constant 0 : index
    %c0_31 = arith.constant 0 : index
    %c0_32 = arith.constant 0 : index
    %75 = vector.load %arg4[%c0_30, %c0_31, %c0_32] : memref<1x1x2xf32, #tpu.memory_space<vmem>>, vector<1x1x2xf32>
    tpu.vector_store %arg4[%c0_30, %c0_31, %c0_32], %74 {strides = array<i32>} : memref<1x1x2xf32, #tpu.memory_space<vmem>>, vector<1x1x2xf32>,
    return
  }
  func.func @transform_0(%arg0: i32) -> (i32, i32, i32) {
    %c0_i32 = arith.constant 0 : i32
    %c0_i32_0 = arith.constant 0 : i32
    %c0_i32_1 = arith.constant 0 : i32
    return %arg0, %c0_i32, %c0_i32_0 : i32, i32, i32
  }
  func.func @transform_1(%arg0: i32) -> (i32, i32, i32) {
    %c0_i32 = arith.constant 0 : i32
    %c0_i32_0 = arith.constant 0 : i32
    %c0_i32_1 = arith.constant 0 : i32
    return %arg0, %c0_i32, %c0_i32_0 : i32, i32, i32
  }
  func.func @transform_2(%arg0: i32) -> (i32, i32, i32) {
    %c0_i32 = arith.constant 0 : i32
    %c0_i32_0 = arith.constant 0 : i32
    %c0_i32_1 = arith.constant 0 : i32
    return %arg0, %c0_i32, %c0_i32_0 : i32, i32, i32
  }
  func.func @transform_3(%arg0: i32) -> (i32, i32, i32) {
    %c0_i32 = arith.constant 0 : i32
    %c0_i32_0 = arith.constant 0 : i32
    %c0_i32_1 = arith.constant 0 : i32
    return %arg0, %c0_i32, %c0_i32_0 : i32, i32, i32
  }
}

</mosaic_0001>

<llo_original>
// kernel: tpu_custom_call.1
$region0: #{tpu_custom_call.1}
  #allocation0 [shape = 'u32[]', space=smem, size = 0x4, offset = 0x4, fixed_abs, tag = 'smem constant byte address 0x4 - core index']
  #allocation1 [shape = 'u32[72,128]{1,0:T(1,128)}', space=vmem, size = 0x9000, scoped, tag = 'internal scratch']
  %s0 = inlined_call_operand.hbm [shape: f32[2,32,128], index: 0, kind: input, shape index: {}]
  %s1 = inlined_call_operand.hbm [shape: f32[2,32,128], index: 1, kind: input, shape index: {}]
  %s2 = inlined_call_operand.hbm [shape: s8[2,32,128], index: 2, kind: input, shape index: {}]
  %s3 = inlined_call_operand.hbm [shape: f32[2,1,2], index: 3, kind: output, shape index: {}]
  %s4 = sld [smem:[#allocation0]]
  $region57: #{tpu_custom_call.1} parent=0
    _
  %s6 = ssub.s32 1, %s4
  %s7 = scalar_select 0, %s6, %s4
  $region1: #{tpu_custom_call.1} parent=0
    #allocation2 [shape = 'u8[32768]{0}', space=vmem, size = 0x8000, scoped, tag = 'input window, operand 0']
    #allocation3 [shape = 's32[2]{0}', space=sflag, size = 0x8, scoped, tag = 'scoped memory for tpu_custom_call.1']
    #allocation4 [shape = 's32[2]{0}', space=sflag, size = 0x8, scoped, tag = 'scoped memory for tpu_custom_call.1']
    #allocation5 [shape = 'u8[32768]{0}', space=vmem, size = 0x8000, scoped, tag = 'input window, operand 1']
    #allocation6 [shape = 's32[2]{0}', space=sflag, size = 0x8, scoped, tag = 'scoped memory for tpu_custom_call.1']
    #allocation7 [shape = 'u8[8192]{0}', space=vmem, size = 0x2000, scoped, tag = 'input window, operand 2']
    #allocation8 [shape = 'u8[1024]{0}', space=vmem, size = 0x400, scoped, tag = 'output window, operand 0']
    %8 = vsyncpa [#allocation3], 0
    %s9 = scalar_lea.sflag [#allocation3], 1
    %10 = vsyncpa %s9, 0
    %11 = vsyncpa [#allocation6], 0
    %s12 = scalar_lea.sflag [#allocation6], 1
    %13 = vsyncpa %s12, 0
    %14 = vsyncpa [#allocation4], 0
    %s15 = scalar_lea.sflag [#allocation4], 1
    %16 = vsyncpa %s15, 0
    loop: start=0, step=1, limit=4
    $region2: #{tpu_custom_call.1} parent=1 // loop_pre_header
      _
    $region3: #{tpu_custom_call.1} parent=1 // loop_header
      %s18 = sphi 0, %s22
      %p19 = scmp.ge.s32.totalorder %s18, 4
      %s28 = sphi 0, %s30
      %s31 = sphi 0, %s28
      %s32 = sphi 0, %s31
      %s48 = sphi 0, %s32
      %s54 = sphi 0, %s56
      %s57 = sphi 0, %s54
      %s58 = sphi 0, %s57
      %s74 = sphi 0, %s58
      %s80 = sphi 0, %s82
      %s83 = sphi 0, %s80
      %s84 = sphi 0, %s83
      %s100 = sphi 0, %s84
      %s106 = sphi 0, %s108
      %s109 = sphi 0, %s106
      %s110 = sphi 0, %s109
      %s126 = sphi 0, %s110
    $region4: #{tpu_custom_call.1} parent=1 // loop_header_branch
      %21 = sbr.rel (%p19) target = $region8
    $region5: #{tpu_custom_call.1} parent=1 // loop_body
      %s23 = ssub.s32 %s18, 1
      %s24 = ssub.s32 %s18, 2
      %s25 = sadd.s32 %s18, 1
      %s26 = ssub.s32 %s18, %s25
      %p27 = scmp.eq.s32.totalorder %s26, 0
      %s29 = sadd.s32 %s28, 1
      %s30 = scalar_select %p27, %s28, %s29
      %p33 = pneg %p27
      %p34 = scmp.eq.s32.totalorder %s18, 1
      %p35 = por %p33, %p34
      %p36 = scmp.ne.s32.totalorder %s28, %s31
      %p37 = scmp.eq.s32.totalorder %s18, 0
      %p38 = por %p36, %p37
      %p39 = scmp.ne.s32.totalorder %s28, %s31
      %p40 = scmp.eq.s32.totalorder %s23, 1
      %p41 = por %p39, %p40
      %p42 = scmp.ne.s32.totalorder %s31, %s32
      %p43 = scmp.eq.s32.totalorder %s23, 0
      %p44 = por %p42, %p43
      %p45 = scmp.ne.s32.totalorder %s31, %s32
      %p46 = scmp.eq.s32.totalorder %s24, 1
      %p47 = por %p45, %p46
      %p49 = scmp.ne.s32.totalorder %s32, %s48
      %p50 = scmp.eq.s32.totalorder %s24, 0
      %p51 = por %p49, %p50
      %s52 = ssub.s32 %s18, %s25
      %p53 = scmp.eq.s32.totalorder %s52, 0
      %s55 = sadd.s32 %s54, 1
      %s56 = scalar_select %p53, %s54, %s55
      %p59 = pneg %p53
      %p60 = scmp.eq.s32.totalorder %s18, 1
      %p61 = por %p59, %p60
      %p62 = scmp.ne.s32.totalorder %s54, %s57
      %p63 = scmp.eq.s32.totalorder %s18, 0
      %p64 = por %p62, %p63
      %p65 = scmp.ne.s32.totalorder %s54, %s57
      %p66 = scmp.eq.s32.totalorder %s23, 1
      %p67 = por %p65, %p66
      %p68 = scmp.ne.s32.totalorder %s57, %s58
      %p69 = scmp.eq.s32.totalorder %s23, 0
      %p70 = por %p68, %p69
      %p71 = scmp.ne.s32.totalorder %s57, %s58
      %p72 = scmp.eq.s32.totalorder %s24, 1
      %p73 = por %p71, %p72
      %p75 = scmp.ne.s32.totalorder %s58, %s74
      %p76 = scmp.eq.s32.totalorder %s24, 0
      %p77 = por %p75, %p76
      %s78 = ssub.s32 %s18, %s25
      %p79 = scmp.eq.s32.totalorder %s78, 0
      %s81 = sadd.s32 %s80, 1
      %s82 = scalar_select %p79, %s80, %s81
      %p85 = pneg %p79
      %p86 = scmp.eq.s32.totalorder %s18, 1
      %p87 = por %p85, %p86
      %p88 = scmp.ne.s32.totalorder %s80, %s83
      %p89 = scmp.eq.s32.totalorder %s18, 0
      %p90 = por %p88, %p89
      %p91 = scmp.ne.s32.totalorder %s80, %s83
      %p92 = scmp.eq.s32.totalorder %s23, 1
      %p93 = por %p91, %p92
      %p94 = scmp.ne.s32.totalorder %s83, %s84
      %p95 = scmp.eq.s32.totalorder %s23, 0
      %p96 = por %p94, %p95
      %p97 = scmp.ne.s32.totalorder %s83, %s84
      %p98 = scmp.eq.s32.totalorder %s24, 1
      %p99 = por %p97, %p98
      %p101 = scmp.ne.s32.totalorder %s84, %s100
      %p102 = scmp.eq.s32.totalorder %s24, 0
      %p103 = por %p101, %p102
      %s104 = ssub.s32 %s18, %s25
      %p105 = scmp.eq.s32.totalorder %s104, 0
      %s107 = sadd.s32 %s106, 1
      %s108 = scalar_select %p105, %s106, %s107
      %p111 = pneg %p105
      %p112 = scmp.eq.s32.totalorder %s18, 1
      %p113 = por %p111, %p112
      %p114 = scmp.ne.s32.totalorder %s106, %s109
      %p115 = scmp.eq.s32.totalorder %s18, 0
      %p116 = por %p114, %p115
      %p117 = scmp.ne.s32.totalorder %s106, %s109
      %p118 = scmp.eq.s32.totalorder %s23, 1
      %p119 = por %p117, %p118
      %p120 = scmp.ne.s32.totalorder %s109, %s110
      %p121 = scmp.eq.s32.totalorder %s23, 0
      %p122 = por %p120, %p121
      %p123 = scmp.ne.s32.totalorder %s109, %s110
      %p124 = scmp.eq.s32.totalorder %s24, 1
      %p125 = por %p123, %p124
      %p127 = scmp.ne.s32.totalorder %s110, %s126
      %p128 = scmp.eq.s32.totalorder %s24, 0
      %p129 = por %p127, %p128
      %p130 = scmp.le.s32.totalorder 1, %s18
      %p131 = scmp.lt.s32.totalorder %s18, 3
      %p132 = pnand %p130, %p131
      %p133 = pneg %p132
      // Predicated region
      $region9: #{tpu_custom_call.1} parent=5 // pred_check
        _
      $region10: #{tpu_custom_call.1} parent=5 // pred_check_branch
        %135 = sbr.rel (%p132) target = $region12
      $region11: #{tpu_custom_call.1} parent=5 // pred_region
        %s136 = ssub.s32 %s18, 1
      $region12: #{tpu_custom_call.1} parent=5 // pred_fallthru
        _
      %p137 = scmp.lt.s32.totalorder %s18, 2
      // Predicated region
      $region13: #{tpu_custom_call.1} parent=5 // pred_check
        %p138 = pneg %p137
      $region14: #{tpu_custom_call.1} parent=5 // pred_check_branch
        %140 = sbr.rel (%p138) target = $region16
      $region15: #{tpu_custom_call.1} parent=5 // pred_region
        // Predicated region
        $region17: #{tpu_custom_call.1} parent=15 // pred_check
          %p141 = pneg %p38
        $region18: #{tpu_custom_call.1} parent=15 // pred_check_branch
          %143 = sbr.rel (%p141) target = $region20
        $region19: #{tpu_custom_call.1} parent=15 // pred_region
          %s144 = sand.u32 %s28, 1
          %s145 = scalar_lea.sflag [#allocation3], %s144
          %s146 = sand.u32 %s28, 1
          %s147 = smul.addr %s146, 32
          %s148 = scalar_lea.vmem [#allocation2], %s147
          %150 = vsyncadd %s145, 0
          %s151 = smul.addr %s18, 4
          %s152 = smul.addr %s151, 8
          %s153 = scalar_lea.hbm %s0, %s152
          %s154 = sshll.u32 %s153, 4
          %s155 = int_to_ptr.hbm [resolvable:$true] %s154
          %s156 = sshll.u32 %s148, 4
          %s157 = int_to_ptr.vmem [resolvable:$true] %s156
          %162 = dma.hbm_to_vmem [thread:$0]  %s155, 512, %s157, %s145, 128, 128, 8
        $region20: #{tpu_custom_call.1} parent=15 // pred_fallthru
          _
        // Predicated region
        $region21: #{tpu_custom_call.1} parent=15 // pred_check
          %p163 = pneg %p64
        $region22: #{tpu_custom_call.1} parent=15 // pred_check_branch
          %165 = sbr.rel (%p163) target = $region24
        $region23: #{tpu_custom_call.1} parent=15 // pred_region
          %s166 = sand.u32 %s18, 1
          %s167 = scalar_lea.sflag [#allocation6], %s166
          %s168 = sand.u32 %s54, 1
          %s169 = smul.addr %s168, 32
          %s170 = scalar_lea.vmem [#allocation5], %s169
          %172 = vsyncadd %s167, 0
          %s173 = smul.addr %s18, 4
          %s174 = smul.addr %s173, 8
          %s175 = scalar_lea.hbm %s1, %s174
          %s176 = sshll.u32 %s175, 4
          %s177 = int_to_ptr.hbm [resolvable:$true] %s176
          %s178 = sshll.u32 %s170, 4
          %s179 = int_to_ptr.vmem [resolvable:$true] %s178
          %184 = dma.hbm_to_vmem [thread:$0]  %s177, 512, %s179, %s167, 128, 128, 8
        $region24: #{tpu_custom_call.1} parent=15 // pred_fallthru
          _
        // Predicated region
        $region25: #{tpu_custom_call.1} parent=15 // pred_check
          %p185 = pneg %p90
        $region26: #{tpu_custom_call.1} parent=15 // pred_check_branch
          %187 = sbr.rel (%p185) target = $region28
        $region27: #{tpu_custom_call.1} parent=15 // pred_region
          %s188 = sand.u32 %s18, 1
          %s189 = scalar_lea.sflag [#allocation6], %s188
          %s190 = sand.u32 %s80, 1
          %s191 = smul.addr %s190, 8
          %s192 = scalar_lea.vmem [#allocation7], %s191
          %194 = vsyncadd %s189, 0
          %s195 = smul.addr %s18, 8
          %s196 = scalar_lea.hbm %s2, %s195
          %s198 = sshll.u32 %s196, 4
          %s199 = int_to_ptr.hbm [resolvable:$true] %s198
          %s200 = sshll.u32 %s192, 4
          %s201 = int_to_ptr.vmem [resolvable:$true] %s200
          %203 = dma.hbm_to_vmem [thread:$0]  %s199, 128, %s201, %s189
        $region28: #{tpu_custom_call.1} parent=15 // pred_fallthru
          _
      $region16: #{tpu_custom_call.1} parent=5 // pred_fallthru
        _
      %p204 = scmp.le.s32.totalorder 1, %s18
      %p205 = scmp.lt.s32.totalorder %s18, 3
      %p206 = pnand %p204, %p205
      %p207 = pneg %p206
      // Predicated region
      $region29: #{tpu_custom_call.1} parent=5 // pred_check
        _
      $region30: #{tpu_custom_call.1} parent=5 // pred_check_branch
        %209 = sbr.rel (%p206) target = $region32
      $region31: #{tpu_custom_call.1} parent=5 // pred_region
        %s210 = ssub.s32 %s18, 1
        %s211 = sand.u32 %s31, 1
        %s212 = scalar_lea.sflag [#allocation3], %s211
        %s213 = sand.u32 %s31, 1
        %s214 = smul.addr %s213, 32
        %s215 = scalar_lea.vmem [#allocation2], %s214
        // Predicated region
        $region33: #{tpu_custom_call.1} parent=31 // pred_check
          %p216 = pneg %p44
        $region34: #{tpu_custom_call.1} parent=31 // pred_check_branch
          %218 = sbr.rel (%p216) target = $region36
        $region35: #{tpu_custom_call.1} parent=31 // pred_region
          %220 = dma.done %s212, 512
        $region36: #{tpu_custom_call.1} parent=31 // pred_fallthru
          _
        %s221 = sand.u32 %s23, 1
        %s222 = scalar_lea.sflag [#allocation6], %s221
        %s223 = sand.u32 %s57, 1
        %s224 = smul.addr %s223, 32
        %s225 = scalar_lea.vmem [#allocation5], %s224
        // Predicated region
        $region37: #{tpu_custom_call.1} parent=31 // pred_check
          %p226 = pneg %p70
        $region38: #{tpu_custom_call.1} parent=31 // pred_check_branch
          %228 = sbr.rel (%p226) target = $region40
        $region39: #{tpu_custom_call.1} parent=31 // pred_region
          %230 = dma.done %s222, 512
        $region40: #{tpu_custom_call.1} parent=31 // pred_fallthru
          _
        %s231 = sand.u32 %s23, 1
        %s232 = scalar_lea.sflag [#allocation6], %s231
        %s233 = sand.u32 %s83, 1
        %s234 = smul.addr %s233, 8
        %s235 = scalar_lea.vmem [#allocation7], %s234
        // Predicated region
        $region41: #{tpu_custom_call.1} parent=31 // pred_check
          %p236 = pneg %p96
        $region42: #{tpu_custom_call.1} parent=31 // pred_check_branch
          %238 = sbr.rel (%p236) target = $region44
        $region43: #{tpu_custom_call.1} parent=31 // pred_region
          %240 = dma.done %s232, 128
        $region44: #{tpu_custom_call.1} parent=31 // pred_fallthru
          _
        %s241 = sand.u32 %s31, 1
        %s242 = scalar_lea.sflag [#allocation3], %s241
        %s243 = sand.u32 %s31, 1
        %s244 = smul.addr %s243, 32
        %s245 = scalar_lea.vmem [#allocation2], %s244
        %p246 = pneg %p44
        %p247 = pneg %p41
        %s248 = sand.u32 %s23, 1
        %s249 = scalar_lea.sflag [#allocation6], %s248
        %s250 = sand.u32 %s57, 1
        %s251 = smul.addr %s250, 32
        %s252 = scalar_lea.vmem [#allocation5], %s251
        %p253 = pneg %p70
        %p254 = pneg %p67
        %s255 = sand.u32 %s23, 1
        %s256 = scalar_lea.sflag [#allocation6], %s255
        %s257 = sand.u32 %s83, 1
        %s258 = smul.addr %s257, 8
        %s259 = scalar_lea.vmem [#allocation7], %s258
        %p260 = pneg %p96
        %p261 = pneg %p93
        %p262 = pneg %p122
        %p263 = pneg %p119
        %s264 = sand.u32 %s109, 1
        %s265 = scalar_lea.sflag [#allocation4], %s264
        %s266 = sand.u32 %s109, 1
        %s267 = scalar_lea.vmem [#allocation8], %s266
        %v268 = vld [vmem:[%s215] sm:$0xff]
        %v269 = vld [vmem:[%s215 + $0x8] sm:$0xff]
        %v270 = vld [vmem:[%s215 + $0x10] sm:$0xff]
        %v271 = vld [vmem:[%s215 + $0x18] sm:$0xff]
        %v272 = vld [vmem:[%s225] sm:$0xff]
        %v273 = vld [vmem:[%s225 + $0x8] sm:$0xff]
        %v274 = vld [vmem:[%s225 + $0x10] sm:$0xff]
        %v275 = vld [vmem:[%s225 + $0x18] sm:$0xff]
        %v276 = vld [vmem:[%s235] sm:$0xff]
        %v277 = vunpack.c.0.s8 %v276
        %v278 = vunpack.c.1.s8 %v276
        %v279 = vunpack.c.2.s8 %v276
        %v280 = vunpack.c.3.s8 %v276
        %v281 = vcvt.s32.f32 %v277
        %v282 = vcvt.s32.f32 %v278
        %v283 = vcvt.s32.f32 %v279
        %v284 = vcvt.s32.f32 %v280
        %v285 = vmul.f32 %v281, %v268
        %v286 = vmul.f32 %v282, %v269
        %v287 = vmul.f32 %v283, %v270
        %v288 = vmul.f32 %v284, %v271
        %v289 = vmul.f32 %v285, %v268
        %v290 = vmul.f32 %v286, %v269
        %v291 = vmul.f32 %v287, %v270
        %v292 = vmul.f32 %v288, %v271
        %v293 = vadd.f32 %v289, %v290
        %v294 = vadd.f32 %v293, %v291
        %v295 = vadd.f32 %v294, %v292
        %v296 = vrot.slane %v295, 4
        %v297 = vadd.f32 %v295, %v296
        %v298 = vrot.slane %v297, 2
        %v299 = vadd.f32 %v297, %v298
        %v300 = vrot.slane %v299, 1
        %v301 = vadd.f32 %v299, %v300
        %302 = vadd.xlane.f32.xlu0 %v301
        %v303 = vpop.xlane.xlu0 %302
        %v304 = vadd.f32 %v285, %v286
        %v305 = vadd.f32 %v304, %v287
        %v306 = vadd.f32 %v305, %v288
        %v307 = vrot.slane %v306, 4
        %v308 = vadd.f32 %v306, %v307
        %v309 = vrot.slane %v308, 2
        %v310 = vadd.f32 %v308, %v309
        %v311 = vrot.slane %v310, 1
        %v312 = vadd.f32 %v310, %v311
        %313 = vadd.xlane.f32.xlu0 %v312
        %v314 = vpop.xlane.xlu0 %313
        %v315 = vadd.f32 %v281, %v282
        %v316 = vadd.f32 %v315, %v283
        %v317 = vadd.f32 %v316, %v284
        %v318 = vrot.slane %v317, 4
        %v319 = vadd.f32 %v317, %v318
        %v320 = vrot.slane %v319, 2
        %v321 = vadd.f32 %v319, %v320
        %v322 = vrot.slane %v321, 1
        %v323 = vadd.f32 %v321, %v322
        %324 = vadd.xlane.f32.xlu0 %v323
        %v325 = vpop.xlane.xlu0 %324
        %v326 = vmul.f32 %v285, %v272
        %v327 = vmul.f32 %v286, %v273
        %v328 = vmul.f32 %v287, %v274
        %v329 = vmul.f32 %v288, %v275
        %v330 = vadd.f32 %v326, %v327
        %v331 = vadd.f32 %v330, %v328
        %v332 = vadd.f32 %v331, %v329
        %v333 = vrot.slane %v332, 4
        %v334 = vadd.f32 %v332, %v333
        %v335 = vrot.slane %v334, 2
        %v336 = vadd.f32 %v334, %v335
        %v337 = vrot.slane %v336, 1
        %v338 = vadd.f32 %v336, %v337
        %339 = vadd.xlane.f32.xlu0 %v338
        %v340 = vpop.xlane.xlu0 %339
        %v341 = vmul.f32 %v281, %v272
        %v342 = vmul.f32 %v282, %v273
        %v343 = vmul.f32 %v283, %v274
        %v344 = vmul.f32 %v284, %v275
        %v345 = vadd.f32 %v341, %v342
        %v346 = vadd.f32 %v345, %v343
        %v347 = vadd.f32 %v346, %v344
        %v348 = vrot.slane %v347, 4
        %v349 = vadd.f32 %v347, %v348
        %v350 = vrot.slane %v349, 2
        %v351 = vadd.f32 %v349, %v350
        %v352 = vrot.slane %v351, 1
        %v353 = vadd.f32 %v351, %v352
        %354 = vadd.xlane.f32.xlu0 %v353
        %v355 = vpop.xlane.xlu0 %354
        %v356 = vmul.f32 %v340, 50.0
        %v357 = vmul.f32 %v314, 0.5
        %v358 = vadd.f32 %v356, %v357
        %v359 = vmul.f32 %v355, 50.0
        %v360 = vmul.f32 %v325, 0.5
        %v361 = vadd.f32 %v359, %v360
        %v362 = vmul.f32 %v303, %v325
        %v363 = vmul.f32 %v314, %v314
        %v364 = vsub.f32 %v362, %v363
        %vm365 = vcmp.ne.f32.partialorder %v364, 0.0
        %v366 = vsel %vm365, %v364, 1.0
        %v367 = vmul.f32 %v325, %v358
        %v368 = vmul.f32 %v314, %v361
        %v369 = vsub.f32 %v367, %v368
        %v370 = vrcp.pop %v366
        %v371 = vmul.f32 %v366, %v370
        %v372 = vsub.f32 1.0, %v371
        %v373 = vmul.f32 %v370, %v372
        %v374 = vadd.f32 %v370, %v373
        %vm375 = vweird.f32 %v366
        %vm376 = vweird.f32 %v370
        %vm377 = vmor %vm375, %vm376
        %v378 = vsel %vm377, %v370, %v374
        %v379 = vand.u32 2147483647, %v366
        %vm380 = vcmp.eq.f32.partialorder %v379, 8.507059e+37
        %v381 = vand.u32 %v366, 2147483648
        %v382 = vor.u32 1.1754944e-38, %v381
        %v383 = vsel %vm380, %v382, %v378
        %v384 = vmul.f32 %v369, %v383
        %v385 = vsel %vm365, %v384, 0.0
        %v386 = vsub.f32 0.0, %v314
        %v387 = vmul.f32 %v386, %v358
        %v388 = vmul.f32 %v303, %v361
        %v389 = vadd.f32 %v387, %v388
        %v390 = vmul.f32 %v389, %v383
        %v391 = vsel %vm365, %v390, 0.0
        %v392 = vmul.f32 %v385, %v268
        %v393 = vmul.f32 %v385, %v269
        %v394 = vmul.f32 %v385, %v270
        %v395 = vmul.f32 %v385, %v271
        %v396 = vsub.f32 %v391, 0.5
        %v397 = vadd.f32 %v392, %v396
        %v398 = vadd.f32 %v393, %v396
        %v399 = vadd.f32 %v394, %v396
        %v400 = vadd.f32 %v395, %v396
        %v401 = vmul.f32 %v272, 50.0
        %v402 = vmul.f32 %v273, 50.0
        %v403 = vmul.f32 %v274, 50.0
        %v404 = vmul.f32 %v275, 50.0
        %v405 = vsub.f32 %v397, %v401
        %v406 = vsub.f32 %v398, %v402
        %v407 = vsub.f32 %v399, %v403
        %v408 = vsub.f32 %v400, %v404
        %v409 = vmul.f32 %v405, %v281
        %v410 = vmul.f32 %v406, %v282
        %v411 = vmul.f32 %v407, %v283
        %v412 = vmul.f32 %v408, %v284
        %v413 = vand.u32 2147483647, %v409
        %v414 = vand.u32 2147483647, %v410
        %v415 = vand.u32 2147483647, %v411
        %v416 = vand.u32 2147483647, %v412
        %v417 = vadd.f32 %v413, %v414
        %v418 = vadd.f32 %v417, %v415
        %v419 = vadd.f32 %v418, %v416
        %v420 = vrot.slane %v419, 4
        %v421 = vadd.f32 %v419, %v420
        %v422 = vrot.slane %v421, 2
        %v423 = vadd.f32 %v421, %v422
        %v424 = vrot.slane %v423, 1
        %v425 = vadd.f32 %v423, %v424
        %426 = vadd.xlane.f32.xlu0 %v425
        %v427 = vpop.xlane.xlu0 %426
        %vm428 = vcmask 7168
        %v429 = vsel %vm428, %v427, %v325
        %vm430 = vcmask 8192
        %431 = vst.msk [vmem:[%s267] sm:$0x1] %vm430, %v429
        %s432 = sand.u32 %s109, 1
        %s433 = scalar_lea.sflag [#allocation4], %s432
        %s434 = sand.u32 %s109, 1
        %s435 = scalar_lea.vmem [#allocation8], %s434
        // Predicated region
        $region45: #{tpu_custom_call.1} parent=31 // pred_check
          %p436 = pneg %p119
        $region46: #{tpu_custom_call.1} parent=31 // pred_check_branch
          %438 = sbr.rel (%p436) target = $region48
        $region47: #{tpu_custom_call.1} parent=31 // pred_region
          %440 = vsyncadd %s433, 0
          %s441 = scalar_lea.hbm %s3, %s23
          %s443 = sshll.u32 %s435, 4
          %s444 = int_to_ptr.vmem [resolvable:$true] %s443
          %s445 = sshll.u32 %s441, 4
          %s446 = int_to_ptr.hbm [resolvable:$true] %s445
          %448 = dma.vmem_to_hbm [thread:$0]  %s444, 16, %s446, %s433
        $region48: #{tpu_custom_call.1} parent=31 // pred_fallthru
          _
      $region32: #{tpu_custom_call.1} parent=5 // pred_fallthru
        _
      %p449 = scmp.le.s32.totalorder 2, %s18
      // Predicated region
      $region49: #{tpu_custom_call.1} parent=5 // pred_check
        %p450 = pneg %p449
      $region50: #{tpu_custom_call.1} parent=5 // pred_check_branch
        %452 = sbr.rel (%p450) target = $region52
      $region51: #{tpu_custom_call.1} parent=5 // pred_region
        %s453 = ssub.s32 %s18, 2
        // Predicated region
        $region53: #{tpu_custom_call.1} parent=51 // pred_check
          %p454 = pneg %p125
        $region54: #{tpu_custom_call.1} parent=51 // pred_check_branch
          %456 = sbr.rel (%p454) target = $region56
        $region55: #{tpu_custom_call.1} parent=51 // pred_region
          %s457 = sand.u32 %s110, 1
          %s458 = scalar_lea.sflag [#allocation4], %s457
          %s459 = sand.u32 %s110, 1
          %s460 = scalar_lea.vmem [#allocation8], %s459
          %462 = dma.done %s458, 16
        $region56: #{tpu_custom_call.1} parent=51 // pred_fallthru
          _
      $region52: #{tpu_custom_call.1} parent=5 // pred_fallthru
        _
    $region6: #{tpu_custom_call.1} parent=1 // loop_footer
      %s22 = sadd.s32 1, %s18
    $region7: #{tpu_custom_call.1} parent=1 // loop_footer_branch
      %17 = sbr.rel target = $region3
    $region8: #{tpu_custom_call.1} parent=1 // loop_exit
      _
    %463 = vsyncpa [#allocation3], 1
    %s464 = scalar_lea.sflag [#allocation3], 1
    %465 = vsyncpa %s464, 1
    %466 = vsyncpa [#allocation6], 1
    %s467 = scalar_lea.sflag [#allocation6], 1
    %468 = vsyncpa %s467, 1
    %469 = vsyncpa [#allocation4], 1
    %s470 = scalar_lea.sflag [#allocation4], 1
    %471 = vsyncpa %s470, 1

</llo_original>
